<compile_context>
chip_gen: v5e
topology: v5e:2x2
jax: 0.10.0
libtpu: 0.0.40
codegen_flags: <defaults>
</compile_context>

<pallas_src>
import functools

import jax
import jax.numpy as jnp
from jax.experimental import pallas as pl
from jax.experimental.pallas import tpu as pltpu


_MAX_LANES = 4096       # cap on lane width (keeps tile_m large so the
                        # per-block (8, lanes) min/max partials stay tiny)
_FALLBACK_LANES = 2048  # lane width for the (rare) padded fallback


def _cdiv(a, b):
    return -(-a // b)


def _round_up(a, m):
    return _cdiv(a, m) * m


def _target_block_bytes():
    # ~4 MiB blocks when VMEM is small (v7x: 64 MiB/TC), ~8 MiB otherwise
    # (v5e/v6e: 128 MiB).  Past ~1-2 MiB we are already at HBM roofline, so
    # the smaller v7x tile costs nothing.
    try:
        cap = pltpu.get_tpu_info().vmem_capacity_bytes
    except Exception:
        cap = 64 << 20  # conservative default
    return (4 << 20) if cap <= (64 << 20) else (8 << 20)


def _choose_view(total, dtype_bytes):
    """Pick a lane-dense 2-D view (rows, lanes, pad_elems) of a flat tensor.

    Prefers a pad-free factorization of `total` with lanes a multiple of 128
    and rows a multiple of 8 (true for almost all image shapes); falls back
    to a pad-free single block, and only then to an edge-padded slab.
    """
    # Pad-free, tileable layout: largest multiple-of-128 divisor <= cap whose
    # row count is a multiple of 8.
    best = None
    l = 128
    while l <= min(total, _MAX_LANES):
        if total % l == 0 and (total // l) % 8 == 0:
            best = (total // l, l)
        l += 128
    if best is not None:
        return best[0], best[1], 0

    # Pad-free single-block layout (rows not a multiple of 8 but small).
    if total % 128 == 0:
        lanes = 128
        l = 128
        while l <= min(total, _MAX_LANES):
            if total % l == 0:
                lanes = l
            l += 128
        rows = total // lanes
        if rows * lanes * dtype_bytes <= (8 << 20):
            return rows, lanes, 0

    # Rare fallback: edge-padded (M, 2048) slab.
    rows = _round_up(_cdiv(total, _FALLBACK_LANES), 8)
    return rows, _FALLBACK_LANES, rows * _FALLBACK_LANES - total


def _choose_tile(rows, lanes, dtype_bytes):
    """Pick (tile_m, num_blocks): tile_m divides rows, ~4-8 MiB blocks,
    and a block count >= 2 (preferably even) so both v7x TensorCores get
    work under the 'parallel' grid axis."""
    if rows % 8 != 0:
        return rows, 1  # single full block (block dim == array dim)
    tile_target = max(8, (_target_block_bytes() // (lanes * dtype_bytes)) // 8 * 8)
    cands = [t for t in range(8, rows + 1, 8) if rows % t == 0 and t <= tile_target]
    if not cands:
        cands = [8]
    best = max(cands, key=lambda t: ((rows // t) >= 2, (rows // t) % 2 == 0, t))
    return best, rows // best


# ---------------------------------------------------------------------------
# Kernel 1: per-block min/max partials (lane-dense output, parallel grid).
# Reduces only down to 8 sublanes (pure VPU min/max across row groups); the
# tiny final reduction over the partials happens in the (jitted) wrapper.
# ---------------------------------------------------------------------------
def _minmax_partial_kernel(x_ref, min_ref, max_ref):
    x = x_ref[...].astype(jnp.float32)            # native dtype in, f32 compute
    tm, lanes = x.shape
    if tm == 8:
        min_ref[...] = x
        max_ref[...] = x
    elif tm % 8 == 0:
        xr = x.reshape(tm // 8, 8, lanes)
        min_ref[...] = jnp.min(xr, axis=0)        # (8, lanes), no XLU reduce
        max_ref[...] = jnp.max(xr, axis=0)
    else:
        # single ragged block (rows not a multiple of 8)
        bmin = jnp.min(x, axis=0, keepdims=True)
        bmax = jnp.max(x, axis=0, keepdims=True)
        min_ref[...] = jnp.broadcast_to(bmin, min_ref.shape)
        max_ref[...] = jnp.broadcast_to(bmax, max_ref.shape)


def _global_minmax(x2d, tile_m, nb, vmem_limit):
    _, lanes = x2d.shape
    pmin, pmax = pl.pallas_call(
        _minmax_partial_kernel,
        out_shape=(
            jax.ShapeDtypeStruct((nb * 8, lanes), jnp.float32),
            jax.ShapeDtypeStruct((nb * 8, lanes), jnp.float32),
        ),
        grid=(nb,),
        in_specs=[pl.BlockSpec((tile_m, lanes), lambda i: (i, 0))],
        out_specs=(
            pl.BlockSpec((8, lanes), lambda i: (i, 0)),
            pl.BlockSpec((8, lanes), lambda i: (i, 0)),
        ),
        compiler_params=pltpu.CompilerParams(
            dimension_semantics=("parallel",),
            vmem_limit_bytes=vmem_limit,
        ),
    )(x2d)
    return jnp.min(pmin), jnp.max(pmax)


# ---------------------------------------------------------------------------
# Kernel 2a: normalized branch (un_normalized=False).
# Scalars (dmax, dmin, bw, 0.5*bw, 0.5*bw+dmin) arrive via SMEM.  True
# division is used so floor boundaries match the reference exactly.
# ---------------------------------------------------------------------------
def _quant_norm_kernel(params_ref, x_ref, o_ref):
    dmax = params_ref[0]
    dmin = params_ref[1]
    bw = params_ref[2]
    half_bw = params_ref[3]
    offset = params_ref[4]        # 0.5*bw + dmin
    x = x_ref[...].astype(jnp.float32)
    x = jnp.where(x == dmax, x - half_bw, x)
    q = jnp.floor((x - dmin) / bw) * bw + offset
    o_ref[...] = q.astype(o_ref.dtype)


# ---------------------------------------------------------------------------
# Kernel 2b: un-normalized branch (un_normalized=True, n_bits < 8).
# All constants are Python-time; (data*255).long().float() emulated by trunc.
# ---------------------------------------------------------------------------
def _quant_unnorm_kernel(x_ref, o_ref, *, n_bits):
    bw = 255.0 / (2 ** n_bits)
    x = x_ref[...].astype(jnp.float32)
    d = jnp.trunc(x * 255.0)                       # matches .long().float()
    d = jnp.where(d == 255.0, d - 0.5 * bw, d)
    d = jnp.floor(d / bw) * bw + 0.5 * bw
    o_ref[...] = (d / 255.0).astype(o_ref.dtype)


# ---------------------------------------------------------------------------
# Wrapper mirroring Quantise2d.forward (jitted; config args are static)
# ---------------------------------------------------------------------------
@functools.partial(jax.jit, static_argnames=("n_bits", "quantise", "un_normalized"))
def quantise2d_forward(x, *, n_bits=1, quantise=True, un_normalized=False):
    """Forward pass of Quantise2d.  x: NCHW tensor (any float dtype)."""
    assert n_bits <= 8
    if not quantise:
        return x

    orig_shape = x.shape
    total = 1
    for s in orig_shape:
        total *= s
    if total == 0:
        return x

    dtype_bytes = x.dtype.itemsize
    rows, lanes, pad = _choose_view(total, dtype_bytes)
    tile_m, nb = _choose_tile(rows, lanes, dtype_bytes)

    x_flat = x.reshape(-1)
    if pad:
        # Rare fallback: edge padding keeps the global min/max unchanged;
        # padded outputs are sliced off below.
        x_flat = jnp.pad(x_flat, (0, pad), mode="edge")
    x2d = x_flat.reshape(rows, lanes)

    block_bytes_f32 = tile_m * lanes * 4
    # double-buffered input + double-buffered output + slack (v5e default
    # scoped VMEM is only 16 MiB, so make this explicit on every generation)
    vmem_limit = min(max(32 << 20, 4 * block_bytes_f32 + (8 << 20)), 100 << 20)

    cp = pltpu.CompilerParams(
        dimension_semantics=("parallel",),
        vmem_limit_bytes=vmem_limit,
    )
    in_tile = pl.BlockSpec((tile_m, lanes), lambda i: (i, 0))
    out_tile = pl.BlockSpec((tile_m, lanes), lambda i: (i, 0))

    if un_normalized and n_bits < 8:
        out2d = pl.pallas_call(
            functools.partial(_quant_unnorm_kernel, n_bits=n_bits),
            out_shape=jax.ShapeDtypeStruct((rows, lanes), x.dtype),
            grid=(nb,),
            in_specs=[in_tile],
            out_specs=out_tile,
            compiler_params=cp,
        )(x2d)
    elif not un_normalized:
        dmin, dmax = _global_minmax(x2d, tile_m, nb, vmem_limit)
        # NOTE: bw == 0 (constant input) yields inf/nan exactly like the
        # PyTorch reference; no extra guard added.
        bw = (dmax - dmin) / (2.0 ** n_bits)
        half_bw = 0.5 * bw
        params = jnp.stack(
            [dmax, dmin, bw, half_bw, half_bw + dmin]
        ).astype(jnp.float32)
        out2d = pl.pallas_call(
            _quant_norm_kernel,
            out_shape=jax.ShapeDtypeStruct((rows, lanes), x.dtype),
            grid=(nb,),
            in_specs=[
                pl.BlockSpec(memory_space=pltpu.MemorySpace.SMEM),
                in_tile,
            ],
            out_specs=out_tile,
            compiler_params=cp,
        )(params, x2d)
    else:
        # matches the PyTorch module: un_normalized=True with n_bits >= 8
        raise ValueError

    if pad:
        out2d = out2d.reshape(-1)[:total]
    return out2d.reshape(orig_shape)


# Pure-JAX reference for correctness checking (mirrors the PyTorch module).
def _reference(x, n_bits=1, un_normalized=False):
    x = x.astype(jnp.float32)
    if un_normalized and n_bits < 8:
        d = jnp.trunc(x * 255.0)
        bw = 255.0 / (2 ** n_bits)
        d = jnp.where(d == 255.0, d - 0.5 * bw, d)
        d = jnp.floor(d / bw) * bw + 0.5 * bw
        return d / 255.0
    dmin, dmax = jnp.min(x), jnp.max(x)
    bw = (dmax - dmin) / (2 ** n_bits)
    x = jnp.where(x == dmax, x - 0.5 * bw, x)
    return jnp.floor((x - dmin) / bw) * bw + (0.5 * bw + dmin)


if __name__ == "__main__":
    key = jax.random.PRNGKey(0)
    x = jax.random.uniform(key, (2, 4, 16, 16), dtype=jnp.float32)  # NCHW

    # Default module config: Quantise2d(n_bits=1, quantise=True, un_normalized=False)
    out_norm = jax.block_until_ready(
        quantise2d_forward(x, n_bits=1, quantise=True, un_normalized=False))
    ref_norm = _reference(x, n_bits=1, un_normalized=False)
    assert out_norm.shape == x.shape and out_norm.dtype == x.dtype
    assert jnp.allclose(out_norm, ref_norm, atol=1e-5), "normalized branch mismatch"

    # Un-normalized branch (n_bits < 8).
    out_un = jax.block_until_ready(
        quantise2d_forward(x, n_bits=2, quantise=True, un_normalized=True))
    ref_un = _reference(x, n_bits=2, un_normalized=True)
    assert jnp.allclose(out_un, ref_un, atol=1e-5), "un-normalized branch mismatch"

    # Multi-block path (exercises the 8-sublane partial reduce and the even
    # block count used for v7x megacore balance): pad-free natural layout.
    kb, kc = jax.random.split(key)
    xb = jax.random.normal(kb, (8, 4, 32, 128), dtype=jnp.float32) * 3.0
    out_b = jax.block_until_ready(
        quantise2d_forward(xb, n_bits=3, quantise=True, un_normalized=False))
    assert jnp.allclose(out_b, _reference(xb, n_bits=3), atol=1e-4), \
        "multi-block normalized branch mismatch"

    # Ragged total (no multiple-of-128 factorization): padded fallback path.
    xc = jax.random.uniform(kc, (2, 3, 15, 15), dtype=jnp.float32)
    out_c = jax.block_until_ready(
        quantise2d_forward(xc, n_bits=1, quantise=True, un_normalized=False))
    assert jnp.allclose(out_c, _reference(xc, n_bits=1), atol=1e-5), \
        "padded-fallback branch mismatch"

    # quantise=False pass-through.
    out_id = quantise2d_forward(x, n_bits=1, quantise=False)
    assert jnp.array_equal(out_id, x)

    print("KERNEL_OK")
</pallas_src>

<mosaic_0001>
module attributes {stable_mosaic.version = 11 : i64} {
  func.func @_minmax_partial_kernel(%arg0: i32, %arg1: memref<8x256xf32, #tpu.memory_space<vmem>>, %arg2: memref<8x256xf32, #tpu.memory_space<vmem>>, %arg3: memref<8x256xf32, #tpu.memory_space<vmem>>) attributes {dimension_semantics = [#tpu.dimension_semantics<parallel>], iteration_bounds = array<i64: 1>, scalar_prefetch = 0 : i64, scratch_operands = 0 : i64, tpu.core_type = #tpu.core_type<tc>, window_params = [{transform_indices = @transform_0, window_bounds = array<i64: 8, 256>}, {transform_indices = @transform_1, window_bounds = array<i64: 8, 256>}, {transform_indices = @transform_2, window_bounds = array<i64: 8, 256>}]} {
    %c0 = arith.constant 0 : index
    %c0_0 = arith.constant 0 : index
    %0 = vector.load %arg1[%c0, %c0_0] : memref<8x256xf32, #tpu.memory_space<vmem>>, vector<8x256xf32>
    %c0_1 = arith.constant 0 : index
    %c0_2 = arith.constant 0 : index
    %1 = vector.load %arg2[%c0_1, %c0_2] : memref<8x256xf32, #tpu.memory_space<vmem>>, vector<8x256xf32>
    tpu.vector_store %arg2[%c0_1, %c0_2], %0 {strides = array<i32>} : memref<8x256xf32, #tpu.memory_space<vmem>>, vector<8x256xf32>,
    %c0_3 = arith.constant 0 : index
    %c0_4 = arith.constant 0 : index
    %2 = vector.load %arg3[%c0_3, %c0_4] : memref<8x256xf32, #tpu.memory_space<vmem>>, vector<8x256xf32>
    tpu.vector_store %arg3[%c0_3, %c0_4], %0 {strides = array<i32>} : memref<8x256xf32, #tpu.memory_space<vmem>>, vector<8x256xf32>,
    return
  }
  func.func @transform_0(%arg0: i32) -> (i32, i32) {
    %c0_i32 = arith.constant 0 : i32
    %c0_i32_0 = arith.constant 0 : i32
    return %arg0, %c0_i32 : i32, i32
  }
  func.func @transform_1(%arg0: i32) -> (i32, i32) {
    %c0_i32 = arith.constant 0 : i32
    %c0_i32_0 = arith.constant 0 : i32
    return %arg0, %c0_i32 : i32, i32
  }
  func.func @transform_2(%arg0: i32) -> (i32, i32) {
    %c0_i32 = arith.constant 0 : i32
    %c0_i32_0 = arith.constant 0 : i32
    return %arg0, %c0_i32 : i32, i32
  }
}

module attributes {stable_mosaic.version = 11 : i64} {
  func.func @_quant_norm_kernel(%arg0: i32, %arg1: memref<5xf32, #tpu.memory_space<smem>>, %arg2: memref<8x256xf32, #tpu.memory_space<vmem>>, %arg3: memref<8x256xf32, #tpu.memory_space<vmem>>) attributes {dimension_semantics = [#tpu.dimension_semantics<parallel>], iteration_bounds = array<i64: 1>, scalar_prefetch = 0 : i64, scratch_operands = 0 : i64, tpu.core_type = #tpu.core_type<tc>, window_params = [{transform_indices = @transform_0, window_bounds = array<i64: 5>}, {transform_indices = @transform_1, window_bounds = array<i64: 8, 256>}, {transform_indices = @transform_2, window_bounds = array<i64: 8, 256>}]} {
    %c0 = arith.constant 0 : index
    %0 = memref.load %arg1[%c0] : memref<5xf32, #tpu.memory_space<smem>>
    %c1 = arith.constant 1 : index
    %1 = memref.load %arg1[%c1] : memref<5xf32, #tpu.memory_space<smem>>
    %c2 = arith.constant 2 : index
    %2 = memref.load %arg1[%c2] : memref<5xf32, #tpu.memory_space<smem>>
    %c3 = arith.constant 3 : index
    %3 = memref.load %arg1[%c3] : memref<5xf32, #tpu.memory_space<smem>>
    %c4 = arith.constant 4 : index
    %4 = memref.load %arg1[%c4] : memref<5xf32, #tpu.memory_space<smem>>
    %c0_0 = arith.constant 0 : index
    %c0_1 = arith.constant 0 : index
    %5 = vector.load %arg2[%c0_0, %c0_1] : memref<8x256xf32, #tpu.memory_space<vmem>>, vector<8x256xf32>
    %6 = vector.broadcast %0 : f32 to vector<8x256xf32>
    %7 = arith.cmpf oeq, %5, %6 : vector<8x256xf32>
    %8 = vector.broadcast %3 : f32 to vector<8x256xf32>
    %9 = arith.subf %5, %8 : vector<8x256xf32>
    %10 = arith.select %7, %9, %5 : vector<8x256xi1>, vector<8x256xf32>
    %11 = vector.broadcast %1 : f32 to vector<8x256xf32>
    %12 = arith.subf %10, %11 : vector<8x256xf32>
    %13 = vector.broadcast %2 : f32 to vector<8x256xf32>
    %14 = arith.divf %12, %13 : vector<8x256xf32>
    %15 = math.floor %14 : vector<8x256xf32>
    %16 = vector.broadcast %2 : f32 to vector<8x256xf32>
    %17 = arith.mulf %15, %16 : vector<8x256xf32>
    %18 = vector.broadcast %4 : f32 to vector<8x256xf32>
    %19 = arith.addf %17, %18 : vector<8x256xf32>
    %c0_2 = arith.constant 0 : index
    %c0_3 = arith.constant 0 : index
    %20 = vector.load %arg3[%c0_2, %c0_3] : memref<8x256xf32, #tpu.memory_space<vmem>>, vector<8x256xf32>
    tpu.vector_store %arg3[%c0_2, %c0_3], %19 {strides = array<i32>} : memref<8x256xf32, #tpu.memory_space<vmem>>, vector<8x256xf32>,
    return
  }
  func.func @transform_0(%arg0: i32) -> i32 {
    %c0_i32 = arith.constant 0 : i32
    %c0_i32_0 = arith.constant 0 : i32
    return %c0_i32 : i32
  }
  func.func @transform_1(%arg0: i32) -> (i32, i32) {
    %c0_i32 = arith.constant 0 : i32
    %c0_i32_0 = arith.constant 0 : i32
    return %arg0, %c0_i32 : i32, i32
  }
  func.func @transform_2(%arg0: i32) -> (i32, i32) {
    %c0_i32 = arith.constant 0 : i32
    %c0_i32_0 = arith.constant 0 : i32
    return %arg0, %c0_i32 : i32, i32
  }
}

</mosaic_0001>

<llo_original>
// kernel: quantise2d_forward.2
$region0: #{quantise2d_forward.2}
  #allocation0 [shape = 'u32[]', space=smem, size = 0x4, offset = 0x4, fixed_abs, tag = 'smem constant byte address 0x4 - core index']
  #allocation1 [shape = 'u32[72,128]{1,0:T(1,128)}', space=vmem, size = 0x9000, scoped, tag = 'internal scratch']
  %s0 = inlined_call_operand.vmem [shape: f32[8,256], index: 0, kind: input, shape index: {}]
  %s1 = inlined_call_operand.vmem [shape: f32[8,256], index: 1, kind: output, shape index: {0}]
  %s2 = inlined_call_operand.vmem [shape: f32[8,256], index: 2, kind: output, shape index: {1}]
  %3 = xla_tuple %s1, %s2
  %s4 = sld [smem:[#allocation0]]
  $region22: #{quantise2d_forward.2} parent=0
    _
  %s6 = ssub.s32 1, %s4
  %s7 = scalar_select 0, %s6, %s4
  // Predicated region
  $region2: #{quantise2d_forward.2} parent=0 // pred_check
    _
  $region3: #{quantise2d_forward.2} parent=0 // pred_check_branch
    %9 = sbr.rel (0) target = $region5
  $region4: #{quantise2d_forward.2} parent=0 // pred_region
    _
  $region5: #{quantise2d_forward.2} parent=0 // pred_fallthru
    _
  %v10 = vld [vmem:[%s0] sm:$0xff]
  %v11 = vld [vmem:[%s0 + $0x8] sm:$0xff]
  %12 = vst [vmem:[%s1] sm:$0xff] %v10
  %13 = vst [vmem:[%s1 + $0x8] sm:$0xff] %v11
  %14 = vst [vmem:[%s2] sm:$0xff] %v10
  %15 = vst [vmem:[%s2 + $0x8] sm:$0xff] %v11
  // Predicated region
  $region6: #{quantise2d_forward.2} parent=0 // pred_check
    _
  $region7: #{quantise2d_forward.2} parent=0 // pred_check_branch
    %17 = sbr.rel (0) target = $region9
  $region8: #{quantise2d_forward.2} parent=0 // pred_region
    _
  $region9: #{quantise2d_forward.2} parent=0 // pred_fallthru
    _
  // Predicated region
  $region10: #{quantise2d_forward.2} parent=0 // pred_check
    _
  $region11: #{quantise2d_forward.2} parent=0 // pred_check_branch
    %19 = sbr.rel (0) target = $region13
  $region12: #{quantise2d_forward.2} parent=0 // pred_region
    _
  $region13: #{quantise2d_forward.2} parent=0 // pred_fallthru
    _
  // Predicated region
  $region14: #{quantise2d_forward.2} parent=0 // pred_check
    _
  $region15: #{quantise2d_forward.2} parent=0 // pred_check_branch
    %21 = sbr.rel (0) target = $region17
  $region16: #{quantise2d_forward.2} parent=0 // pred_region
    _
  $region17: #{quantise2d_forward.2} parent=0 // pred_fallthru
    _
  // Predicated region
  $region18: #{quantise2d_forward.2} parent=0 // pred_check
    _
  $region19: #{quantise2d_forward.2} parent=0 // pred_check_branch
    %23 = sbr.rel (0) target = $region21
  $region20: #{quantise2d_forward.2} parent=0 // pred_region
    _
  $region21: #{quantise2d_forward.2} parent=0 // pred_fallthru
    _

// kernel: quantise2d_forward.3
$region0: #{quantise2d_forward.3}
  #allocation0 [shape = 'u32[]', space=smem, size = 0x4, offset = 0x4, fixed_abs, tag = 'smem constant byte address 0x4 - core index']
  #allocation1 [shape = 'u32[72,128]{1,0:T(1,128)}', space=vmem, size = 0x9000, scoped, tag = 'internal scratch']
  %s0 = inlined_call_operand.vmem [shape: f32[5], index: 0, kind: input, shape index: {}]
  %s1 = inlined_call_operand.vmem [shape: f32[8,256], index: 1, kind: input, shape index: {}]
  %s2 = inlined_call_operand.vmem [shape: f32[8,256], index: 2, kind: output, shape index: {}]
  %s3 = sld [smem:[#allocation0]]
  $region22: #{quantise2d_forward.3} parent=0
    _
  %s5 = ssub.s32 1, %s3
  %s6 = scalar_select 0, %s5, %s3
  $region1: #{quantise2d_forward.3} parent=0
    #allocation2 [shape = 'u8[512]{0}', space=smem, size = 0x200, scoped, tag = 'input window, operand 0, single buffered']
    #allocation3 [shape = 's32[1]{0}', space=sflag, size = 0x4, scoped, tag = 'scoped memory for quantise2d_forward.3']
    %7 = vsyncpa [#allocation3], 0
    // Predicated region
    $region2: #{quantise2d_forward.3} parent=1 // pred_check
      _
    $region3: #{quantise2d_forward.3} parent=1 // pred_check_branch
      %9 = sbr.rel (0) target = $region5
    $region4: #{quantise2d_forward.3} parent=1 // pred_region
      %11 = vsyncadd [#allocation3], 0
      %s13 = sshll.u32 %s0, 4
      %s14 = int_to_ptr.vmem [resolvable:$true] %s13
      %16 = dma.vmem_to_smem %s14, 16, [#allocation2], [#allocation3]
    $region5: #{quantise2d_forward.3} parent=1 // pred_fallthru
      _
    // Predicated region
    $region6: #{quantise2d_forward.3} parent=1 // pred_check
      _
    $region7: #{quantise2d_forward.3} parent=1 // pred_check_branch
      %18 = sbr.rel (0) target = $region9
    $region8: #{quantise2d_forward.3} parent=1 // pred_region
      _
    $region9: #{quantise2d_forward.3} parent=1 // pred_fallthru
      _
    // Predicated region
    $region10: #{quantise2d_forward.3} parent=1 // pred_check
      _
    $region11: #{quantise2d_forward.3} parent=1 // pred_check_branch
      %20 = sbr.rel (0) target = $region13
    $region12: #{quantise2d_forward.3} parent=1 // pred_region
      %22 = dma.done [#allocation3], 16
    $region13: #{quantise2d_forward.3} parent=1 // pred_fallthru
      _
    %23 = sfence
    %s24 = sld [smem:[#allocation2]]
    %s25 = sld [smem:[#allocation2 + $0x1]]
    %s26 = sld [smem:[#allocation2 + $0x2]]
    %s27 = sld [smem:[#allocation2 + $0x3]]
    %s28 = sld [smem:[#allocation2 + $0x4]]
    %v29 = vld [vmem:[%s1] sm:$0xff]
    %v30 = vld [vmem:[%s1 + $0x8] sm:$0xff]
    %v31 = vstv %s24
    %vm32 = vcmp.eq.f32.partialorder %v29, %v31
    %vm33 = vcmp.eq.f32.partialorder %v30, %v31
    %v34 = vstv %s27
    %v35 = vsub.f32 %v29, %v34
    %v36 = vsub.f32 %v30, %v34
    %v37 = vsel %vm32, %v35, %v29
    %v38 = vsel %vm33, %v36, %v30
    %v39 = vstv %s25
    %v40 = vsub.f32 %v37, %v39
    %v41 = vsub.f32 %v38, %v39
    %v42 = vstv %s26
    %v43 = vrcp.pop %v42
    %v44 = vmul.f32 %v42, %v43
    %v45 = vsub.f32 1.0, %v44
    %v46 = vmul.f32 %v43, %v45
    %v47 = vadd.f32 %v43, %v46
    %vm48 = vweird.f32 %v42
    %vm49 = vweird.f32 %v43
    %vm50 = vmor %vm48, %vm49
    %v51 = vsel %vm50, %v43, %v47
    %v52 = vand.u32 2147483647, %v42
    %vm53 = vcmp.eq.f32.partialorder %v52, 8.507059e+37
    %v54 = vand.u32 %v42, 2147483648
    %v55 = vor.u32 1.1754944e-38, %v54
    %v56 = vsel %vm53, %v55, %v51
    %v57 = vmul.f32 %v40, %v56
    %v58 = vmul.f32 %v41, %v56
    %v59 = vfloor.f32 %v57
    %v60 = vfloor.f32 %v58
    %v61 = vmul.f32 %v59, %v42
    %v62 = vmul.f32 %v60, %v42
    %v63 = vstv %s28
    %v64 = vadd.f32 %v61, %v63
    %v65 = vadd.f32 %v62, %v63
    %66 = vst [vmem:[%s2] sm:$0xff] %v64
    %67 = vst [vmem:[%s2 + $0x8] sm:$0xff] %v65
    // Predicated region
    $region14: #{quantise2d_forward.3} parent=1 // pred_check
      _
    $region15: #{quantise2d_forward.3} parent=1 // pred_check_branch
      %69 = sbr.rel (0) target = $region17
    $region16: #{quantise2d_forward.3} parent=1 // pred_region
      _
    $region17: #{quantise2d_forward.3} parent=1 // pred_fallthru
      _
    // Predicated region
    $region18: #{quantise2d_forward.3} parent=1 // pred_check
      _
    $region19: #{quantise2d_forward.3} parent=1 // pred_check_branch
      %71 = sbr.rel (0) target = $region21
    $region20: #{quantise2d_forward.3} parent=1 // pred_region
      _
    $region21: #{quantise2d_forward.3} parent=1 // pred_fallthru
      _
    %72 = vsyncpa [#allocation3], 1

</llo_original>
